<compile_context>
chip_gen: v6e
topology: v6e:2x2x1
jax: 0.10.0
libtpu: 0.0.40
codegen_flags: <defaults>
</compile_context>

<pallas_src>
import numpy as np
import jax
import jax.numpy as jnp
from jax.experimental import pallas as pl
from jax.experimental.pallas import tpu as pltpu


# ----------------------------------------------------------------------------
# Static "Cyclic Positional Encoding" table (learned=False path).
# Pure host-side numpy parameter construction — direct port of the PyTorch __init__.
# ----------------------------------------------------------------------------
def cyclic_positional_encoding_table(num_embeddings: int, embedding_dim: int,
                                     mean_pooling: bool = True) -> np.ndarray:
    skip_base = np.power(num_embeddings, 1 / (embedding_dim // 2))
    skip_set = np.linspace(skip_base, num_embeddings, embedding_dim // 2, dtype="int")
    x = np.zeros((num_embeddings, embedding_dim))

    def basesin(v, omiga, fai=0):
        T = 2 * np.pi / omiga
        return np.sin(omiga * np.abs(np.mod(v, 2 * T) - T) + fai)

    def basecos(v, omiga, fai=0):
        T = 2 * np.pi / omiga
        return np.cos(omiga * np.abs(np.mod(v, 2 * T) - T) + fai)

    for i in range(embedding_dim):
        skip = (skip_set[i // 3 * 3 + 1]
                if i // 3 * 3 + 1 < embedding_dim // 2 else skip_set[-1])
        if num_embeddings > skip:
            longer_pattern = np.arange(0, np.ceil(num_embeddings / skip) * skip + 0.01, 0.01)
        else:
            longer_pattern = np.arange(0, num_embeddings + 0.01, 0.01)
            skip = num_embeddings
        num = len(longer_pattern) - 1
        omiga = 2 * np.pi / skip
        fai = (0 if i <= embedding_dim // 2
               else 2 * np.pi * ((-i + embedding_dim // 2) / (embedding_dim // 2)))
        sel = np.linspace(0, num, num_embeddings + 1, dtype="int")
        if i % 2 == 1:
            x[:, i] = basecos(longer_pattern, omiga, fai)[sel][:num_embeddings]
        else:
            x[:, i] = basesin(longer_pattern, omiga, fai)[sel][:num_embeddings]

    pattern = x.astype(np.float32)
    pattern_sum = np.zeros_like(pattern)
    arange = np.arange(num_embeddings)
    pooling = [0] if not mean_pooling else [-2, -1, 0, 1, 2]
    time = 0
    for i in pooling:
        time += 1
        index = (arange + i + num_embeddings) % num_embeddings
        pattern_sum += pattern[index]
    pattern = 1.0 / time * pattern_sum - pattern.mean(0, keepdims=True)
    return pattern.astype(np.float32)


# ----------------------------------------------------------------------------
# Pallas kernel
#   grid = (num_T_tiles, num_B_tiles)   — both axes fully parallel (no carried state)
#   x_ref  : VMEM (Bb, C, tile_t)       — folded-batch x block
#   pe_ref : VMEM (C, tile_t)           — PE slab slice for this T-tile (streamed, tiny)
#   o_ref  : VMEM (Bb, C, tile_t)       — output block
# Pure VPU broadcast-add in the promoted dtype; the op is HBM-bound, so all the work is in
# keeping the DMA pipeline fed with large lane-dense blocks.
# ----------------------------------------------------------------------------
def _rpe_add_kernel(x_ref, pe_ref, o_ref):
    o_ref[...] = (x_ref[...] + pe_ref[...]).astype(o_ref.dtype)


def _vmem_budget_bytes() -> int:
    """Generation-aware scoped-VMEM target: ~2/3 of physical VMEM
    (~85 MiB on v5e/v6e's 128 MiB, ~42 MiB on v7x's 64 MiB per TensorCore)."""
    try:
        cap = int(pltpu.get_tpu_info().vmem_capacity_bytes)
    except Exception:
        cap = 64 * 1024 * 1024  # conservative fallback (v7x-sized / CPU interpret mode)
    return min(cap * 2 // 3, 96 * 1024 * 1024)


def _pick_blocks(B, C, T, x_itemsize, out_itemsize, pe_itemsize,
                 vmem_budget, max_block_bytes=None):
    """Choose (Bb, tile_t) so each x/out block is ~1-4 MiB (HBM-roofline sweet spot) and
    the double-buffered footprint stays within the per-generation VMEM budget."""
    if max_block_bytes is None:
        max_block_bytes = max(256 * 1024, min(4 * 1024 * 1024, vmem_budget // 12))
    item = max(x_itemsize, out_itemsize)

    # T (lane) tiling: full T when it already fits (also exempt from the 128-multiple rule),
    # otherwise a lane-dense multiple of 128.
    if C * T * item <= max_block_bytes or T <= 512:
        tile_t = T
    else:
        lanes = (max_block_bytes // (C * item)) // 128 * 128
        tile_t = int(max(128, min(max(lanes, 128), (T // 128) * 128)))
        if tile_t >= T:
            tile_t = T

    # Batch folding: largest divisor of B keeping the block under the byte target.
    row_bytes = C * tile_t * item
    Bb = 1
    for cand in range(B, 0, -1):
        if B % cand == 0 and cand * row_bytes <= max(max_block_bytes, row_bytes):
            Bb = cand
            break

    # Double-buffered pipeline footprint (x + out + pe blocks); fail loudly if oversized.
    footprint = 2 * (Bb * C * tile_t * (x_itemsize + out_itemsize)
                     + C * tile_t * pe_itemsize)
    if footprint > vmem_budget:
        # TODO(synk): add a channel(C)-tiling path for extremely large embed dims.
        raise ValueError(
            f"RecyclingPositionalEncoding block footprint {footprint} B (double-buffered) "
            f"exceeds the VMEM budget {vmem_budget} B for embed_dim={C}, T={T}.")
    return Bb, tile_t, footprint


def recycling_positional_encoding_forward(x, pe_table, state_index,
                                          forward_update_index_steps=1,
                                          update_index_steps=None,
                                          max_block_bytes=None):
    """Functional equivalent of RecyclingPositionalEncoding.forward.

    x:           (B, C, T) array
    pe_table:    (num_embeds, C) array (nn.Embedding.weight or cyclic pattern)
    state_index: int or traced scalar — current recycling offset
    Returns (output (B, C, T), new_state_index (int32 scalar)).
    """
    B, C, T = x.shape
    N, C_tbl = pe_table.shape
    assert C_tbl == C, "embedding_dim must match channel dim of x"
    assert T <= N, "T must be <= num_embeds"

    out_dtype = jnp.result_type(x.dtype, pe_table.dtype)
    state0 = jnp.asarray(state_index, dtype=jnp.int32) % N

    # PE slab for this call.  The recycled positions (arange(T)+state) % N are at most two
    # contiguous ranges of the table, so this is O(C*T) layout plumbing in the wrapper
    # (single tiny gather + transpose), not compute-hoisting: the kernel streams lane-dense
    # (C, tile_t) slices of this slab and the table itself never has to sit in VMEM.
    pos_ids = (jnp.arange(T, dtype=jnp.int32) + state0) % N          # (T,)
    pe_slab = jnp.transpose(jnp.take(pe_table, pos_ids, axis=0), (1, 0))  # (C, T)

    x_item = jnp.dtype(x.dtype).itemsize
    out_item = jnp.dtype(out_dtype).itemsize
    pe_item = jnp.dtype(pe_slab.dtype).itemsize
    vmem_budget = _vmem_budget_bytes()
    Bb, tile_t, footprint = _pick_blocks(B, C, T, x_item, out_item, pe_item,
                                         vmem_budget, max_block_bytes)
    grid = (pl.cdiv(T, tile_t), B // Bb)

    # Purely memory-bound: one add per output element.
    cost = pl.CostEstimate(
        flops=B * C * T,
        transcendentals=0,
        bytes_accessed=B * C * T * (x_item + out_item) + grid[1] * C * T * pe_item,
    )

    out = pl.pallas_call(
        _rpe_add_kernel,
        out_shape=jax.ShapeDtypeStruct((B, C, T), out_dtype),
        grid=grid,
        in_specs=[
            pl.BlockSpec((Bb, C, tile_t), lambda t, b: (b, 0, t)),   # x block
            pl.BlockSpec((C, tile_t), lambda t, b: (0, t)),          # PE slab slice
        ],
        out_specs=pl.BlockSpec((Bb, C, tile_t), lambda t, b: (b, 0, t)),
        compiler_params=pltpu.CompilerParams(
            # No cross-step carry anywhere -> both axes megacore-shardable.
            dimension_semantics=("parallel", "parallel"),
            vmem_limit_bytes=int(min(max(2 * footprint, 32 * 1024 * 1024), vmem_budget)),
        ),
        cost_estimate=cost,
    )(x, pe_slab)

    index_update = (forward_update_index_steps
                    if update_index_steps is None else update_index_steps)
    new_state_index = (state0 + jnp.int32(index_update)) % N
    return out, new_state_index

# TODO(synk): forward_step / _forward_step (single time-step streaming, T=1) reuse this same
# add with T=1 / update_index_steps=1; for that path a C-last (lane-dense) layout would avoid
# masked partial stores, but it is left as-is to keep the (B, C, T) module layout.


# ----------------------------------------------------------------------------
# Demo / correctness checks
# ----------------------------------------------------------------------------
def _reference(x, pe_table, state_index):
    T = x.shape[2]
    N = pe_table.shape[0]
    pos_ids = (jnp.arange(T) + state_index) % N          # (T,)
    pe = pe_table[pos_ids]                               # (T, C)
    return x + jnp.transpose(pe, (1, 0))[None, :, :]     # (B, C, T)


if __name__ == "__main__":
    key = jax.random.PRNGKey(0)

    # --- Case 1: shapes consistent with the module's example (learned=True path) ---
    B, C, T = 2, 32, 16
    num_embeds = 2 * T - 1  # 31

    k_x, k_w, k_x2 = jax.random.split(key, 3)
    x = jax.random.normal(k_x, (B, C, T), dtype=jnp.float32)
    pe_table = jax.random.normal(k_w, (num_embeds, C), dtype=jnp.float32)  # nn.Embedding.weight

    state_index = 3
    out, new_state = recycling_positional_encoding_forward(
        x, pe_table, state_index, forward_update_index_steps=1)
    out = jax.block_until_ready(out)

    ref = _reference(x, pe_table, state_index)
    np.testing.assert_allclose(np.asarray(out), np.asarray(ref), rtol=1e-6, atol=1e-6)
    assert int(new_state) == (state_index + 1) % num_embeds

    # --- Case 2: learned=False path (Cyclic Positional Encoding table) ---
    cyc_table = jnp.asarray(cyclic_positional_encoding_table(num_embeds, C))
    out2, _ = recycling_positional_encoding_forward(x, cyc_table, 0,
                                                    forward_update_index_steps=1)
    out2 = jax.block_until_ready(out2)
    ref2 = _reference(x, cyc_table, 0)
    np.testing.assert_allclose(np.asarray(out2), np.asarray(ref2), rtol=1e-5, atol=1e-5)

    # --- Case 3: exercise the tiled grid (tile_t=512, Bb=1 forced via max_block_bytes)
    #             and the circular wrap-around (state near N) ---
    T3 = 1024
    N3 = 2 * T3 - 1  # 2047
    x3 = jax.random.normal(k_x2, (B, C, T3), dtype=jnp.float32)
    tbl3 = jax.random.normal(jax.random.fold_in(k_w, 1), (N3, C), dtype=jnp.float32)
    state3 = N3 - 5  # forces (t + state) % N wrap
    out3, new_state3 = recycling_positional_encoding_forward(
        x3, tbl3, state3, forward_update_index_steps=7, max_block_bytes=64 * 1024)
    out3 = jax.block_until_ready(out3)
    ref3 = _reference(x3, tbl3, state3)
    np.testing.assert_allclose(np.asarray(out3), np.asarray(ref3), rtol=1e-6, atol=1e-6)
    assert int(new_state3) == (state3 + 7) % N3

    print("KERNEL_OK")
</pallas_src>

<mosaic_0001>
module attributes {stable_mosaic.version = 11 : i64} {
  func.func @_rpe_add_kernel(%arg0: i32, %arg1: i32, %arg2: memref<2x32x16xf32, #tpu.memory_space<vmem>>, %arg3: memref<32x16xf32, #tpu.memory_space<vmem>>, %arg4: memref<2x32x16xf32, #tpu.memory_space<vmem>>) attributes {dimension_semantics = [#tpu.dimension_semantics<parallel>, #tpu.dimension_semantics<parallel>], iteration_bounds = array<i64: 1, 1>, scalar_prefetch = 0 : i64, scratch_operands = 0 : i64, tpu.core_type = #tpu.core_type<tc>, window_params = [{transform_indices = @transform_0, window_bounds = array<i64: 2, 32, 16>}, {transform_indices = @transform_1, window_bounds = array<i64: 32, 16>}, {transform_indices = @transform_2, window_bounds = array<i64: 2, 32, 16>}]} {
    %c0 = arith.constant 0 : index
    %c0_0 = arith.constant 0 : index
    %c0_1 = arith.constant 0 : index
    %0 = vector.load %arg2[%c0, %c0_0, %c0_1] : memref<2x32x16xf32, #tpu.memory_space<vmem>>, vector<2x32x16xf32>
    %c0_2 = arith.constant 0 : index
    %c0_3 = arith.constant 0 : index
    %1 = vector.load %arg3[%c0_2, %c0_3] : memref<32x16xf32, #tpu.memory_space<vmem>>, vector<32x16xf32>
    %2 = vector.shape_cast %1 : vector<32x16xf32> to vector<1x32x16xf32>
    %3 = vector.broadcast %2 : vector<1x32x16xf32> to vector<2x32x16xf32>
    %4 = arith.addf %0, %3 : vector<2x32x16xf32>
    %c0_4 = arith.constant 0 : index
    %c0_5 = arith.constant 0 : index
    %c0_6 = arith.constant 0 : index
    %5 = vector.load %arg4[%c0_4, %c0_5, %c0_6] : memref<2x32x16xf32, #tpu.memory_space<vmem>>, vector<2x32x16xf32>
    tpu.vector_store %arg4[%c0_4, %c0_5, %c0_6], %4 {strides = array<i32>} : memref<2x32x16xf32, #tpu.memory_space<vmem>>, vector<2x32x16xf32>,
    return
  }
  func.func @transform_0(%arg0: i32, %arg1: i32) -> (i32, i32, i32) {
    %c0_i32 = arith.constant 0 : i32
    %c0_i32_0 = arith.constant 0 : i32
    return %arg1, %c0_i32, %arg0 : i32, i32, i32
  }
  func.func @transform_1(%arg0: i32, %arg1: i32) -> (i32, i32) {
    %c0_i32 = arith.constant 0 : i32
    %c0_i32_0 = arith.constant 0 : i32
    return %c0_i32, %arg0 : i32, i32
  }
  func.func @transform_2(%arg0: i32, %arg1: i32) -> (i32, i32, i32) {
    %c0_i32 = arith.constant 0 : i32
    %c0_i32_0 = arith.constant 0 : i32
    return %arg1, %c0_i32, %arg0 : i32, i32, i32
  }
}

</mosaic_0001>

<llo_original>
// kernel: tpu_custom_call.1
$region0: #{tpu_custom_call.1}
  #allocation0 [shape = 'u32[]', space=smem, size = 0x4, offset = 0x4, fixed_abs, tag = 'smem constant byte address 0x4 - core index']
  #allocation1 [shape = 'u32[144,128]{1,0:T(1,128)}', space=vmem, size = 0x12000, scoped, tag = 'internal scratch']
  %s0 = inlined_call_operand.vmem [shape: f32[2,32,16], index: 0, kind: input, shape index: {}]
  %s1 = inlined_call_operand.vmem [shape: f32[32,16], index: 1, kind: input, shape index: {}]
  %s2 = inlined_call_operand.vmem [shape: f32[2,32,16], index: 2, kind: output, shape index: {}]
  %s3 = sld [smem:[#allocation0]]
  $region18: #{tpu_custom_call.1} parent=0
    _
  %s5 = ssub.s32 1, %s3
  %s6 = scalar_select 0, %s5, %s3
  // Predicated region
  $region2: #{tpu_custom_call.1} parent=0 // pred_check
    _
  $region3: #{tpu_custom_call.1} parent=0 // pred_check_branch
    %8 = sbr.rel (0) target = $region5
  $region4: #{tpu_custom_call.1} parent=0 // pred_region
    _
  $region5: #{tpu_custom_call.1} parent=0 // pred_fallthru
    _
  // Predicated region
  $region6: #{tpu_custom_call.1} parent=0 // pred_check
    _
  $region7: #{tpu_custom_call.1} parent=0 // pred_check_branch
    %10 = sbr.rel (0) target = $region9
  $region8: #{tpu_custom_call.1} parent=0 // pred_region
    _
  $region9: #{tpu_custom_call.1} parent=0 // pred_fallthru
    _
  %v11 = vld [vmem:[%s0] sm:$0xff]
  %v12 = vld [vmem:[%s0 + $0x8] sm:$0xff]
  %v13 = vld [vmem:[%s0 + $0x10] sm:$0xff]
  %v14 = vld [vmem:[%s0 + $0x18] sm:$0xff]
  %v15 = vld [vmem:[%s0 + $0x20] sm:$0xff]
  %v16 = vld [vmem:[%s0 + $0x28] sm:$0xff]
  %v17 = vld [vmem:[%s0 + $0x30] sm:$0xff]
  %v18 = vld [vmem:[%s0 + $0x38] sm:$0xff]
  %v19 = vld [vmem:[%s1] sm:$0xff]
  %v20 = vld [vmem:[%s1 + $0x8] sm:$0xff]
  %v21 = vld [vmem:[%s1 + $0x10] sm:$0xff]
  %v22 = vld [vmem:[%s1 + $0x18] sm:$0xff]
  %v23 = vadd.f32 %v11, %v19
  %v24 = vadd.f32 %v12, %v20
  %v25 = vadd.f32 %v13, %v21
  %v26 = vadd.f32 %v14, %v22
  %v27 = vadd.f32 %v15, %v19
  %v28 = vadd.f32 %v16, %v20
  %v29 = vadd.f32 %v17, %v21
  %v30 = vadd.f32 %v18, %v22
  %vm31 = vcmask 130048
  %32 = vst.msk [vmem:[%s2] sm:$0xff] %vm31, %v23
  %33 = vst.msk [vmem:[%s2 + $0x8] sm:$0xff] %vm31, %v24
  %34 = vst.msk [vmem:[%s2 + $0x10] sm:$0xff] %vm31, %v25
  %35 = vst.msk [vmem:[%s2 + $0x18] sm:$0xff] %vm31, %v26
  %36 = vst.msk [vmem:[%s2 + $0x20] sm:$0xff] %vm31, %v27
  %37 = vst.msk [vmem:[%s2 + $0x28] sm:$0xff] %vm31, %v28
  %38 = vst.msk [vmem:[%s2 + $0x30] sm:$0xff] %vm31, %v29
  %39 = vst.msk [vmem:[%s2 + $0x38] sm:$0xff] %vm31, %v30
  // Predicated region
  $region10: #{tpu_custom_call.1} parent=0 // pred_check
    _
  $region11: #{tpu_custom_call.1} parent=0 // pred_check_branch
    %41 = sbr.rel (0) target = $region13
  $region12: #{tpu_custom_call.1} parent=0 // pred_region
    _
  $region13: #{tpu_custom_call.1} parent=0 // pred_fallthru
    _
  // Predicated region
  $region14: #{tpu_custom_call.1} parent=0 // pred_check
    _
  $region15: #{tpu_custom_call.1} parent=0 // pred_check_branch
    %43 = sbr.rel (0) target = $region17
  $region16: #{tpu_custom_call.1} parent=0 // pred_region
    _
  $region17: #{tpu_custom_call.1} parent=0 // pred_fallthru
    _

</llo_original>
